<compile_context>
chip_gen: v5e
topology: v5e:2x2
jax: 0.10.0
libtpu: 0.0.40
codegen_flags: <defaults>
</compile_context>

<pallas_src>
import jax
import jax.numpy as jnp
from jax.experimental import pallas as pl
from jax.experimental.pallas import tpu as pltpu

_LANES = 128


def _round_up(x, m):
    return ((x + m - 1) // m) * m


def _select_config():
    """(max_block_rows, num_core_splits, vmem_limit_bytes) per TPU generation."""
    kind = ""
    try:
        kind = jax.devices()[0].device_kind.lower()
    except Exception:
        pass
    single_tc = ("v5 lite" in kind or "v5lite" in kind or "v5e" in kind
                 or "v6" in kind)
    if single_tc:
        # Deeply HBM-bound chips with 128 MiB VMEM: amortize the ~0.35 us
        # per-grid-step overhead with 4 MiB/input blocks.
        return 8192, 1, 64 * 1024 * 1024
    # v7x (2 TCs, 64 MiB VMEM per TC) and unknown chips: smaller blocks,
    # conservative VMEM cap, 2-way core split on the leading grid axis.
    return 4096, 2, 32 * 1024 * 1024


def _make_kernel(rows_valid, blocks_per_core, block_rows, acc_rows):
    folds = block_rows // acc_rows

    def kernel(logits_ref, labels_ref, w_ref, num_ref, den_ref):
        c = pl.program_id(0)
        i = pl.program_id(1)

        @pl.when(i == 0)
        def _():
            num_ref[...] = jnp.zeros_like(num_ref)
            den_ref[...] = jnp.zeros_like(den_ref)

        x = logits_ref[...].astype(jnp.float32)
        g = labels_ref[...].astype(jnp.float32)
        w = w_ref[...].astype(jnp.float32)

        # Numerically stable BCE-with-logits, same formula as the PyTorch ref.
        loss = jnp.maximum(x, 0.0) - x * g + jnp.log1p(jnp.exp(-jnp.abs(x)))

        def fold(v):
            # (block_rows, 128) -> (1, acc_rows, 128): `folds` independent
            # accumulation chains, sublane-aligned reshape, VPU adds only.
            return jnp.sum(v.reshape(folds, acc_rows, _LANES), axis=0)[None]

        block_start = (c * blocks_per_core + i) * block_rows
        is_full = block_start + block_rows <= rows_valid

        # Fast path: interior blocks are entirely in-bounds -> no mask work.
        @pl.when(is_full)
        def _():
            num_ref[...] += fold(loss * w)
            den_ref[...] += fold(w)

        # Slow path: tail / phantom (clamped) blocks may contain rows past the
        # end of the input (undefined DMA contents); mask them out.  The
        # select is applied AFTER loss*w, so non-finite garbage is discarded.
        @pl.when(jnp.logical_not(is_full))
        def _():
            row_ids = block_start + jax.lax.broadcasted_iota(
                jnp.int32, (block_rows, _LANES), 0)
            valid = row_ids < rows_valid
            num_ref[...] += fold(jnp.where(valid, loss * w, 0.0))
            den_ref[...] += fold(jnp.where(valid, w, 0.0))

    return kernel


@jax.jit
def weighted_bce_loss_2d(logits, labels, weights):
    max_block_rows, num_cores, vmem_bytes = _select_config()

    n = logits.size
    pad = (-n) % _LANES
    rows = (n + pad) // _LANES

    def as_rows(a):
        # Native dtype is kept (no f32 materialization); kernel upcasts in VMEM.
        flat = jnp.reshape(a, (-1,))
        if pad:  # only copies when numel is not a multiple of 128
            flat = jnp.pad(flat, (0, pad))
        return flat.reshape(rows, _LANES)

    lg, lb, wt = as_rows(logits), as_rows(labels), as_rows(weights)

    # Shrink the block for small inputs; keep rows-per-block a multiple of 8
    # and pick the widest accumulator depth (<=64 rows) that divides it.
    block_rows = min(max_block_rows, _round_up(rows, 8))
    acc_rows = max(r for r in (8, 16, 32, 64) if block_rows % r == 0)

    total_blocks = pl.cdiv(rows, block_rows)
    bpc = pl.cdiv(total_blocks, num_cores)   # blocks per core
    grid = (num_cores, bpc)

    def in_map(c, i):
        # Clamp phantom trailing blocks onto the last real block; the kernel's
        # masked path zeroes their contribution.
        return (jnp.minimum(c * bpc + i, total_blocks - 1), 0)

    in_spec = pl.BlockSpec((block_rows, _LANES), in_map)
    out_spec = pl.BlockSpec((1, acc_rows, _LANES), lambda c, i: (c, 0, 0))

    kernel = _make_kernel(rows, bpc, block_rows, acc_rows)

    num_p, den_p = pl.pallas_call(
        kernel,
        out_shape=(
            jax.ShapeDtypeStruct((num_cores, acc_rows, _LANES), jnp.float32),
            jax.ShapeDtypeStruct((num_cores, acc_rows, _LANES), jnp.float32),
        ),
        grid_spec=pltpu.PrefetchScalarGridSpec(
            num_scalar_prefetch=0,
            grid=grid,
            in_specs=[in_spec, in_spec, in_spec],
            out_specs=(out_spec, out_spec),
        ),
        compiler_params=pltpu.CompilerParams(
            dimension_semantics=("parallel", "arbitrary"),
            vmem_limit_bytes=vmem_bytes,
        ),
    )(lg, lb, wt)

    # Tiny final cross-lane reduce + divide outside the kernel.
    return jnp.sum(num_p) / jnp.sum(den_p)


def _reference(logits, labels, weights):
    x = jnp.ravel(logits).astype(jnp.float32)
    g = jnp.ravel(labels).astype(jnp.float32)
    w = jnp.ravel(weights).astype(jnp.float32)
    loss = jnp.maximum(x, 0.0) - x * g + jnp.log1p(jnp.exp(-jnp.abs(x)))
    return jnp.sum(loss * w) / jnp.sum(w)


if __name__ == "__main__":
    key = jax.random.PRNGKey(0)
    k1, k2, k3 = jax.random.split(key, 3)

    B, C, H, W = 2, 4, 16, 16  # NCHW, as the PyTorch module would receive
    logits = jax.random.normal(k1, (B, C, H, W), dtype=jnp.float32) * 2.0
    labels = (jax.random.uniform(k2, (B, C, H, W)) > 0.5).astype(jnp.float32)
    weights = jax.random.uniform(k3, (B, C, H, W), dtype=jnp.float32) + 0.1

    out = weighted_bce_loss_2d(logits, labels, weights)
    jax.block_until_ready(out)

    ref = _reference(logits, labels, weights)
    assert jnp.allclose(out, ref, rtol=1e-5, atol=1e-5), (out, ref)

    print("KERNEL_OK")
</pallas_src>

<mosaic_0001>
module attributes {stable_mosaic.version = 11 : i64} {
  func.func @kernel(%arg0: i32, %arg1: i32, %arg2: memref<16x128xf32, #tpu.memory_space<vmem>>, %arg3: memref<16x128xf32, #tpu.memory_space<vmem>>, %arg4: memref<16x128xf32, #tpu.memory_space<vmem>>, %arg5: memref<1x16x128xf32, #tpu.memory_space<vmem>>, %arg6: memref<1x16x128xf32, #tpu.memory_space<vmem>>) attributes {dimension_semantics = [#tpu.dimension_semantics<parallel>, #tpu.dimension_semantics<arbitrary>], iteration_bounds = array<i64: 2, 1>, scalar_prefetch = 0 : i64, scratch_operands = 0 : i64, tpu.core_type = #tpu.core_type<tc>, window_params = [{transform_indices = @transform_0, window_bounds = array<i64: 16, 128>}, {transform_indices = @transform_1, window_bounds = array<i64: 16, 128>}, {transform_indices = @transform_2, window_bounds = array<i64: 16, 128>}, {transform_indices = @transform_3, window_bounds = array<i64: 1, 16, 128>}, {transform_indices = @transform_4, window_bounds = array<i64: 1, 16, 128>}]} {
    %c0_i32 = arith.constant 0 : i32
    %0 = arith.cmpi eq, %arg1, %c0_i32 : i32
    %1 = arith.extui %0 : i1 to i32
    %c0_i32_0 = arith.constant 0 : i32
    %2 = arith.cmpi ne, %1, %c0_i32_0 : i32
    scf.if %2 {
      %cst_11 = arith.constant 0.000000e+00 : f32
      %26 = vector.broadcast %cst_11 : f32 to vector<1x16x128xf32>
      %c0_12 = arith.constant 0 : index
      %c0_13 = arith.constant 0 : index
      %c0_14 = arith.constant 0 : index
      %27 = vector.load %arg5[%c0_12, %c0_13, %c0_14] : memref<1x16x128xf32, #tpu.memory_space<vmem>>, vector<1x16x128xf32>
      tpu.vector_store %arg5[%c0_12, %c0_13, %c0_14], %26 {strides = array<i32>} : memref<1x16x128xf32, #tpu.memory_space<vmem>>, vector<1x16x128xf32>,
      %cst_15 = arith.constant 0.000000e+00 : f32
      %28 = vector.broadcast %cst_15 : f32 to vector<1x16x128xf32>
      %c0_16 = arith.constant 0 : index
      %c0_17 = arith.constant 0 : index
      %c0_18 = arith.constant 0 : index
      %29 = vector.load %arg6[%c0_16, %c0_17, %c0_18] : memref<1x16x128xf32, #tpu.memory_space<vmem>>, vector<1x16x128xf32>
      tpu.vector_store %arg6[%c0_16, %c0_17, %c0_18], %28 {strides = array<i32>} : memref<1x16x128xf32, #tpu.memory_space<vmem>>, vector<1x16x128xf32>,
    } else {
    }
    %c0 = arith.constant 0 : index
    %c0_1 = arith.constant 0 : index
    %3 = vector.load %arg2[%c0, %c0_1] : memref<16x128xf32, #tpu.memory_space<vmem>>, vector<16x128xf32>
    %c0_2 = arith.constant 0 : index
    %c0_3 = arith.constant 0 : index
    %4 = vector.load %arg3[%c0_2, %c0_3] : memref<16x128xf32, #tpu.memory_space<vmem>>, vector<16x128xf32>
    %c0_4 = arith.constant 0 : index
    %c0_5 = arith.constant 0 : index
    %5 = vector.load %arg4[%c0_4, %c0_5] : memref<16x128xf32, #tpu.memory_space<vmem>>, vector<16x128xf32>
    %cst = arith.constant 0.000000e+00 : f32
    %6 = vector.broadcast %cst : f32 to vector<16x128xf32>
    %7 = arith.maximumf %3, %6 : vector<16x128xf32>
    %8 = arith.mulf %3, %4 : vector<16x128xf32>
    %9 = arith.subf %7, %8 : vector<16x128xf32>
    %10 = math.absf %3 : vector<16x128xf32>
    %cst_6 = arith.constant 0.000000e+00 : f32
    %11 = vector.broadcast %cst_6 : f32 to vector<16x128xf32>
    %12 = arith.subf %11, %10 : vector<16x128xf32>
    %13 = math.exp %12 : vector<16x128xf32>
    %14 = math.log1p %13 : vector<16x128xf32>
    %15 = arith.addf %9, %14 : vector<16x128xf32>
    %c1_i32 = arith.constant 1 : i32
    %16 = arith.muli %arg0, %c1_i32 : i32
    %17 = arith.addi %16, %arg1 : i32
    %c16_i32 = arith.constant 16 : i32
    %18 = arith.muli %17, %c16_i32 : i32
    %c16_i32_7 = arith.constant 16 : i32
    %19 = arith.addi %18, %c16_i32_7 : i32
    %c16_i32_8 = arith.constant 16 : i32
    %20 = arith.cmpi sle, %19, %c16_i32_8 : i32
    %21 = arith.extui %20 : i1 to i32
    %c0_i32_9 = arith.constant 0 : i32
    %22 = arith.cmpi ne, %21, %c0_i32_9 : i32
    scf.if %22 {
      %c0_11 = arith.constant 0 : index
      %c0_12 = arith.constant 0 : index
      %c0_13 = arith.constant 0 : index
      %26 = vector.load %arg5[%c0_11, %c0_12, %c0_13] : memref<1x16x128xf32, #tpu.memory_space<vmem>>, vector<1x16x128xf32>
      %27 = arith.mulf %15, %5 : vector<16x128xf32>
      %28 = vector.shape_cast %27 : vector<16x128xf32> to vector<1x16x128xf32>
      %cst_14 = arith.constant dense<0.000000e+00> : vector<16x128xf32>
      %29 = vector.multi_reduction <add>, %28, %cst_14 [0] : vector<1x16x128xf32> to vector<16x128xf32>
      %30 = vector.shape_cast %29 : vector<16x128xf32> to vector<1x16x128xf32>
      %31 = arith.addf %26, %30 : vector<1x16x128xf32>
      %c0_15 = arith.constant 0 : index
      %c0_16 = arith.constant 0 : index
      %c0_17 = arith.constant 0 : index
      %32 = vector.load %arg5[%c0_15, %c0_16, %c0_17] : memref<1x16x128xf32, #tpu.memory_space<vmem>>, vector<1x16x128xf32>
      tpu.vector_store %arg5[%c0_15, %c0_16, %c0_17], %31 {strides = array<i32>} : memref<1x16x128xf32, #tpu.memory_space<vmem>>, vector<1x16x128xf32>,
      %c0_18 = arith.constant 0 : index
      %c0_19 = arith.constant 0 : index
      %c0_20 = arith.constant 0 : index
      %33 = vector.load %arg6[%c0_18, %c0_19, %c0_20] : memref<1x16x128xf32, #tpu.memory_space<vmem>>, vector<1x16x128xf32>
      %34 = vector.shape_cast %5 : vector<16x128xf32> to vector<1x16x128xf32>
      %cst_21 = arith.constant dense<0.000000e+00> : vector<16x128xf32>
      %35 = vector.multi_reduction <add>, %34, %cst_21 [0] : vector<1x16x128xf32> to vector<16x128xf32>
      %36 = vector.shape_cast %35 : vector<16x128xf32> to vector<1x16x128xf32>
      %37 = arith.addf %33, %36 : vector<1x16x128xf32>
      %c0_22 = arith.constant 0 : index
      %c0_23 = arith.constant 0 : index
      %c0_24 = arith.constant 0 : index
      %38 = vector.load %arg6[%c0_22, %c0_23, %c0_24] : memref<1x16x128xf32, #tpu.memory_space<vmem>>, vector<1x16x128xf32>
      tpu.vector_store %arg6[%c0_22, %c0_23, %c0_24], %37 {strides = array<i32>} : memref<1x16x128xf32, #tpu.memory_space<vmem>>, vector<1x16x128xf32>,
    } else {
    }
    %true = arith.constant true
    %23 = arith.xori %20, %true : i1
    %24 = arith.extui %23 : i1 to i32
    %c0_i32_10 = arith.constant 0 : i32
    %25 = arith.cmpi ne, %24, %c0_i32_10 : i32
    scf.if %25 {
      %26 = tpu.iota {dimensions = array<i32: 0>} : vector<16x128xi32>
      %27 = vector.broadcast %18 : i32 to vector<16x128xi32>
      %28 = arith.addi %27, %26 : vector<16x128xi32>
      %c16_i32_11 = arith.constant 16 : i32
      %29 = vector.broadcast %c16_i32_11 : i32 to vector<16x128xi32>
      %30 = arith.cmpi slt, %28, %29 : vector<16x128xi32>
      %c0_12 = arith.constant 0 : index
      %c0_13 = arith.constant 0 : index
      %c0_14 = arith.constant 0 : index
      %31 = vector.load %arg5[%c0_12, %c0_13, %c0_14] : memref<1x16x128xf32, #tpu.memory_space<vmem>>, vector<1x16x128xf32>
      %32 = arith.mulf %15, %5 : vector<16x128xf32>
      %cst_15 = arith.constant 0.000000e+00 : f32
      %33 = vector.broadcast %cst_15 : f32 to vector<16x128xf32>
      %34 = arith.select %30, %32, %33 : vector<16x128xi1>, vector<16x128xf32>
      %35 = vector.shape_cast %34 : vector<16x128xf32> to vector<1x16x128xf32>
      %cst_16 = arith.constant dense<0.000000e+00> : vector<16x128xf32>
      %36 = vector.multi_reduction <add>, %35, %cst_16 [0] : vector<1x16x128xf32> to vector<16x128xf32>
      %37 = vector.shape_cast %36 : vector<16x128xf32> to vector<1x16x128xf32>
      %38 = arith.addf %31, %37 : vector<1x16x128xf32>
      %c0_17 = arith.constant 0 : index
      %c0_18 = arith.constant 0 : index
      %c0_19 = arith.constant 0 : index
      %39 = vector.load %arg5[%c0_17, %c0_18, %c0_19] : memref<1x16x128xf32, #tpu.memory_space<vmem>>, vector<1x16x128xf32>
      tpu.vector_store %arg5[%c0_17, %c0_18, %c0_19], %38 {strides = array<i32>} : memref<1x16x128xf32, #tpu.memory_space<vmem>>, vector<1x16x128xf32>,
      %c0_20 = arith.constant 0 : index
      %c0_21 = arith.constant 0 : index
      %c0_22 = arith.constant 0 : index
      %40 = vector.load %arg6[%c0_20, %c0_21, %c0_22] : memref<1x16x128xf32, #tpu.memory_space<vmem>>, vector<1x16x128xf32>
      %cst_23 = arith.constant 0.000000e+00 : f32
      %41 = vector.broadcast %cst_23 : f32 to vector<16x128xf32>
      %42 = arith.select %30, %5, %41 : vector<16x128xi1>, vector<16x128xf32>
      %43 = vector.shape_cast %42 : vector<16x128xf32> to vector<1x16x128xf32>
      %cst_24 = arith.constant dense<0.000000e+00> : vector<16x128xf32>
      %44 = vector.multi_reduction <add>, %43, %cst_24 [0] : vector<1x16x128xf32> to vector<16x128xf32>
      %45 = vector.shape_cast %44 : vector<16x128xf32> to vector<1x16x128xf32>
      %46 = arith.addf %40, %45 : vector<1x16x128xf32>
      %c0_25 = arith.constant 0 : index
      %c0_26 = arith.constant 0 : index
      %c0_27 = arith.constant 0 : index
      %47 = vector.load %arg6[%c0_25, %c0_26, %c0_27] : memref<1x16x128xf32, #tpu.memory_space<vmem>>, vector<1x16x128xf32>
      tpu.vector_store %arg6[%c0_25, %c0_26, %c0_27], %46 {strides = array<i32>} : memref<1x16x128xf32, #tpu.memory_space<vmem>>, vector<1x16x128xf32>,
    } else {
    }
    return
  }
  func.func @transform_0(%arg0: i32, %arg1: i32) -> (i32, i32) {
    %c1_i32 = arith.constant 1 : i32
    %0 = arith.muli %arg0, %c1_i32 : i32
    %1 = arith.addi %0, %arg1 : i32
    %c0_i32 = arith.constant 0 : i32
    %2 = arith.minsi %1, %c0_i32 : i32
    %c0_i32_0 = arith.constant 0 : i32
    %c0_i32_1 = arith.constant 0 : i32
    return %2, %c0_i32_0 : i32, i32
  }
  func.func @transform_1(%arg0: i32, %arg1: i32) -> (i32, i32) {
    %c1_i32 = arith.constant 1 : i32
    %0 = arith.muli %arg0, %c1_i32 : i32
    %1 = arith.addi %0, %arg1 : i32
    %c0_i32 = arith.constant 0 : i32
    %2 = arith.minsi %1, %c0_i32 : i32
    %c0_i32_0 = arith.constant 0 : i32
    %c0_i32_1 = arith.constant 0 : i32
    return %2, %c0_i32_0 : i32, i32
  }
  func.func @transform_2(%arg0: i32, %arg1: i32) -> (i32, i32) {
    %c1_i32 = arith.constant 1 : i32
    %0 = arith.muli %arg0, %c1_i32 : i32
    %1 = arith.addi %0, %arg1 : i32
    %c0_i32 = arith.constant 0 : i32
    %2 = arith.minsi %1, %c0_i32 : i32
    %c0_i32_0 = arith.constant 0 : i32
    %c0_i32_1 = arith.constant 0 : i32
    return %2, %c0_i32_0 : i32, i32
  }
  func.func @transform_3(%arg0: i32, %arg1: i32) -> (i32, i32, i32) {
    %c0_i32 = arith.constant 0 : i32
    %c0_i32_0 = arith.constant 0 : i32
    %c0_i32_1 = arith.constant 0 : i32
    return %arg0, %c0_i32, %c0_i32_0 : i32, i32, i32
  }
  func.func @transform_4(%arg0: i32, %arg1: i32) -> (i32, i32, i32) {
    %c0_i32 = arith.constant 0 : i32
    %c0_i32_0 = arith.constant 0 : i32
    %c0_i32_1 = arith.constant 0 : i32
    return %arg0, %c0_i32, %c0_i32_0 : i32, i32, i32
  }
}

</mosaic_0001>

<llo_original>
// kernel: weighted_bce_loss_2d.1
$region0: #{weighted_bce_loss_2d.1}
  #allocation0 [shape = 'u32[]', space=smem, size = 0x4, offset = 0x4, fixed_abs, tag = 'smem constant byte address 0x4 - core index']
  #allocation1 [shape = 'u32[72,128]{1,0:T(1,128)}', space=vmem, size = 0x9000, scoped, tag = 'internal scratch']
  %s0 = inlined_call_operand.vmem [shape: f32[16,128], index: 0, kind: input, shape index: {}]
  %s1 = inlined_call_operand.vmem [shape: f32[16,128], index: 1, kind: input, shape index: {}]
  %s2 = inlined_call_operand.vmem [shape: f32[16,128], index: 2, kind: input, shape index: {}]
  %s3 = inlined_call_operand.vmem [shape: f32[2,16,128], index: 3, kind: output, shape index: {0}]
  %s4 = inlined_call_operand.vmem [shape: f32[2,16,128], index: 4, kind: output, shape index: {1}]
  %5 = xla_tuple %s3, %s4
  %s6 = sld [smem:[#allocation0]]
  $region65: #{weighted_bce_loss_2d.1} parent=0
    _
  %s8 = ssub.s32 1, %s6
  %s9 = scalar_select 0, %s8, %s6
  loop: start=0, step=1, limit=4
  $region2: #{weighted_bce_loss_2d.1} parent=0 // loop_pre_header
    _
  $region3: #{weighted_bce_loss_2d.1} parent=0 // loop_header
    %s11 = sphi 0, %s15
    %p12 = scmp.ge.s32.totalorder %s11, 4
    %s18 = sphi 0, %s30
    %s19 = sphi 0, %s26
    %s20 = sphi 0, %s18
    %s21 = sphi 0, %s19
    %s22 = sphi 0, %s20
    %s23 = sphi 0, %s21
    %s39 = sphi 0, %s41
    %s42 = sphi 0, %s39
    %s43 = sphi 0, %s42
    %s59 = sphi 0, %s43
    %s71 = sphi 0, %s73
    %s74 = sphi 0, %s71
    %s75 = sphi 0, %s74
    %s91 = sphi 0, %s75
    %s103 = sphi 0, %s105
    %s106 = sphi 0, %s103
    %s107 = sphi 0, %s106
    %s123 = sphi 0, %s107
    %s129 = sphi 0, %s131
    %s132 = sphi 0, %s129
    %s133 = sphi 0, %s132
    %s149 = sphi 0, %s133
    %s155 = sphi 0, %s157
    %s158 = sphi 0, %s155
    %s159 = sphi 0, %s158
    %s175 = sphi 0, %s159
  $region4: #{weighted_bce_loss_2d.1} parent=0 // loop_header_branch
    %14 = sbr.rel (%p12) target = $region8
  $region5: #{weighted_bce_loss_2d.1} parent=0 // loop_body
    %s16 = ssub.s32 %s11, 1
    %s17 = ssub.s32 %s11, 2
    %s24 = sadd.s32 1, %s19
    %p25 = scmp.ge.s32.totalorder %s24, 1
    %s26 = scalar_select %p25, 0, %s24
    %s27 = sadd.s32 1, %s18
    %s28 = scalar_select %p25, %s27, %s18
    %p29 = scmp.ge.s32.totalorder %s28, 2
    %s30 = scalar_select %p29, 0, %s28
    %s31 = sadd.s32 %s18, %s19
    %p32 = scmp.lt.s32.totalorder %s31, 0
    %s33 = scalar_select %p32, %s31, 0
    %s34 = sadd.s32 %s30, %s26
    %p35 = scmp.lt.s32.totalorder %s34, 0
    %s36 = scalar_select %p35, %s34, 0
    %s37 = ssub.s32 %s33, %s36
    %p38 = scmp.eq.s32.totalorder %s37, 0
    %s40 = sadd.s32 %s39, 1
    %s41 = scalar_select %p38, %s39, %s40
    %p44 = pneg %p38
    %p45 = scmp.eq.s32.totalorder %s11, 1
    %p46 = por %p44, %p45
    %p47 = scmp.ne.s32.totalorder %s39, %s42
    %p48 = scmp.eq.s32.totalorder %s11, 0
    %p49 = por %p47, %p48
    %p50 = scmp.ne.s32.totalorder %s39, %s42
    %p51 = scmp.eq.s32.totalorder %s16, 1
    %p52 = por %p50, %p51
    %p53 = scmp.ne.s32.totalorder %s42, %s43
    %p54 = scmp.eq.s32.totalorder %s16, 0
    %p55 = por %p53, %p54
    %p56 = scmp.ne.s32.totalorder %s42, %s43
    %p57 = scmp.eq.s32.totalorder %s17, 1
    %p58 = por %p56, %p57
    %p60 = scmp.ne.s32.totalorder %s43, %s59
    %p61 = scmp.eq.s32.totalorder %s17, 0
    %p62 = por %p60, %p61
    %s63 = sadd.s32 %s18, %s19
    %p64 = scmp.lt.s32.totalorder %s63, 0
    %s65 = scalar_select %p64, %s63, 0
    %s66 = sadd.s32 %s30, %s26
    %p67 = scmp.lt.s32.totalorder %s66, 0
    %s68 = scalar_select %p67, %s66, 0
    %s69 = ssub.s32 %s65, %s68
    %p70 = scmp.eq.s32.totalorder %s69, 0
    %s72 = sadd.s32 %s71, 1
    %s73 = scalar_select %p70, %s71, %s72
    %p76 = pneg %p70
    %p77 = scmp.eq.s32.totalorder %s11, 1
    %p78 = por %p76, %p77
    %p79 = scmp.ne.s32.totalorder %s71, %s74
    %p80 = scmp.eq.s32.totalorder %s11, 0
    %p81 = por %p79, %p80
    %p82 = scmp.ne.s32.totalorder %s71, %s74
    %p83 = scmp.eq.s32.totalorder %s16, 1
    %p84 = por %p82, %p83
    %p85 = scmp.ne.s32.totalorder %s74, %s75
    %p86 = scmp.eq.s32.totalorder %s16, 0
    %p87 = por %p85, %p86
    %p88 = scmp.ne.s32.totalorder %s74, %s75
    %p89 = scmp.eq.s32.totalorder %s17, 1
    %p90 = por %p88, %p89
    %p92 = scmp.ne.s32.totalorder %s75, %s91
    %p93 = scmp.eq.s32.totalorder %s17, 0
    %p94 = por %p92, %p93
    %s95 = sadd.s32 %s18, %s19
    %p96 = scmp.lt.s32.totalorder %s95, 0
    %s97 = scalar_select %p96, %s95, 0
    %s98 = sadd.s32 %s30, %s26
    %p99 = scmp.lt.s32.totalorder %s98, 0
    %s100 = scalar_select %p99, %s98, 0
    %s101 = ssub.s32 %s97, %s100
    %p102 = scmp.eq.s32.totalorder %s101, 0
    %s104 = sadd.s32 %s103, 1
    %s105 = scalar_select %p102, %s103, %s104
    %p108 = pneg %p102
    %p109 = scmp.eq.s32.totalorder %s11, 1
    %p110 = por %p108, %p109
    %p111 = scmp.ne.s32.totalorder %s103, %s106
    %p112 = scmp.eq.s32.totalorder %s11, 0
    %p113 = por %p111, %p112
    %p114 = scmp.ne.s32.totalorder %s103, %s106
    %p115 = scmp.eq.s32.totalorder %s16, 1
    %p116 = por %p114, %p115
    %p117 = scmp.ne.s32.totalorder %s106, %s107
    %p118 = scmp.eq.s32.totalorder %s16, 0
    %p119 = por %p117, %p118
    %p120 = scmp.ne.s32.totalorder %s106, %s107
    %p121 = scmp.eq.s32.totalorder %s17, 1
    %p122 = por %p120, %p121
    %p124 = scmp.ne.s32.totalorder %s107, %s123
    %p125 = scmp.eq.s32.totalorder %s17, 0
    %p126 = por %p124, %p125
    %s127 = ssub.s32 %s18, %s30
    %p128 = scmp.eq.s32.totalorder %s127, 0
    %s130 = sadd.s32 %s129, 1
    %s131 = scalar_select %p128, %s129, %s130
    %p134 = pneg %p128
    %p135 = scmp.eq.s32.totalorder %s11, 1
    %p136 = por %p134, %p135
    %p137 = scmp.ne.s32.totalorder %s129, %s132
    %p138 = scmp.eq.s32.totalorder %s11, 0
    %p139 = por %p137, %p138
    %p140 = scmp.ne.s32.totalorder %s129, %s132
    %p141 = scmp.eq.s32.totalorder %s16, 1
    %p142 = por %p140, %p141
    %p143 = scmp.ne.s32.totalorder %s132, %s133
    %p144 = scmp.eq.s32.totalorder %s16, 0
    %p145 = por %p143, %p144
    %p146 = scmp.ne.s32.totalorder %s132, %s133
    %p147 = scmp.eq.s32.totalorder %s17, 1
    %p148 = por %p146, %p147
    %p150 = scmp.ne.s32.totalorder %s133, %s149
    %p151 = scmp.eq.s32.totalorder %s17, 0
    %p152 = por %p150, %p151
    %s153 = ssub.s32 %s18, %s30
    %p154 = scmp.eq.s32.totalorder %s153, 0
    %s156 = sadd.s32 %s155, 1
    %s157 = scalar_select %p154, %s155, %s156
    %p160 = pneg %p154
    %p161 = scmp.eq.s32.totalorder %s11, 1
    %p162 = por %p160, %p161
    %p163 = scmp.ne.s32.totalorder %s155, %s158
    %p164 = scmp.eq.s32.totalorder %s11, 0
    %p165 = por %p163, %p164
    %p166 = scmp.ne.s32.totalorder %s155, %s158
    %p167 = scmp.eq.s32.totalorder %s16, 1
    %p168 = por %p166, %p167
    %p169 = scmp.ne.s32.totalorder %s158, %s159
    %p170 = scmp.eq.s32.totalorder %s16, 0
    %p171 = por %p169, %p170
    %p172 = scmp.ne.s32.totalorder %s158, %s159
    %p173 = scmp.eq.s32.totalorder %s17, 1
    %p174 = por %p172, %p173
    %p176 = scmp.ne.s32.totalorder %s159, %s175
    %p177 = scmp.eq.s32.totalorder %s17, 0
    %p178 = por %p176, %p177
    %p179 = scmp.le.s32.totalorder 1, %s11
    %p180 = scmp.lt.s32.totalorder %s11, 3
    %p181 = pnand %p179, %p180
    %p182 = pneg %p181
    // Predicated region
    $region9: #{weighted_bce_loss_2d.1} parent=5 // pred_check
      _
    $region10: #{weighted_bce_loss_2d.1} parent=5 // pred_check_branch
      %184 = sbr.rel (%p181) target = $region12
    $region11: #{weighted_bce_loss_2d.1} parent=5 // pred_region
      %s185 = ssub.s32 %s11, 1
    $region12: #{weighted_bce_loss_2d.1} parent=5 // pred_fallthru
      _
    %p186 = scmp.lt.s32.totalorder %s11, 2
    // Predicated region
    $region13: #{weighted_bce_loss_2d.1} parent=5 // pred_check
      %p187 = pneg %p186
    $region14: #{weighted_bce_loss_2d.1} parent=5 // pred_check_branch
      %189 = sbr.rel (%p187) target = $region16
    $region15: #{weighted_bce_loss_2d.1} parent=5 // pred_region
      // Predicated region
      $region17: #{weighted_bce_loss_2d.1} parent=15 // pred_check
        %p190 = pneg %p49
      $region18: #{weighted_bce_loss_2d.1} parent=15 // pred_check_branch
        %192 = sbr.rel (%p190) target = $region20
      $region19: #{weighted_bce_loss_2d.1} parent=15 // pred_region
        %s193 = sadd.s32 %s18, %s19
        %p194 = scmp.lt.s32.totalorder %s193, 0
        %s195 = scalar_select %p194, %s193, 0
        %s196 = smul.u32 2, %s195
        %p197 = scmp.lt.s32.totalorder %s196, 1
        %s198 = scalar_select %p197, %s196, 1
        %s199 = smul.addr %s198, 8
        %s200 = scalar_lea.vmem %s0, %s199
        %s201 = sadd.s32 %s18, %s19
        %p202 = scmp.lt.s32.totalorder %s201, 0
        %s203 = scalar_select %p202, %s201, 0
        %s204 = smul.u32 2, %s203
      $region20: #{weighted_bce_loss_2d.1} parent=15 // pred_fallthru
        _
      // Predicated region
      $region21: #{weighted_bce_loss_2d.1} parent=15 // pred_check
        %p205 = pneg %p81
      $region22: #{weighted_bce_loss_2d.1} parent=15 // pred_check_branch
        %207 = sbr.rel (%p205) target = $region24
      $region23: #{weighted_bce_loss_2d.1} parent=15 // pred_region
        %s208 = sadd.s32 %s18, %s19
        %p209 = scmp.lt.s32.totalorder %s208, 0
        %s210 = scalar_select %p209, %s208, 0
        %s211 = smul.u32 2, %s210
        %p212 = scmp.lt.s32.totalorder %s211, 1
        %s213 = scalar_select %p212, %s211, 1
        %s214 = smul.addr %s213, 8
        %s215 = scalar_lea.vmem %s1, %s214
        %s216 = sadd.s32 %s18, %s19
        %p217 = scmp.lt.s32.totalorder %s216, 0
        %s218 = scalar_select %p217, %s216, 0
        %s219 = smul.u32 2, %s218
      $region24: #{weighted_bce_loss_2d.1} parent=15 // pred_fallthru
        _
      // Predicated region
      $region25: #{weighted_bce_loss_2d.1} parent=15 // pred_check
        %p220 = pneg %p113
      $region26: #{weighted_bce_loss_2d.1} parent=15 // pred_check_branch
        %222 = sbr.rel (%p220) target = $region28
      $region27: #{weighted_bce_loss_2d.1} parent=15 // pred_region
        %s223 = sadd.s32 %s18, %s19
        %p224 = scmp.lt.s32.totalorder %s223, 0
        %s225 = scalar_select %p224, %s223, 0
        %s226 = smul.u32 2, %s225
        %p227 = scmp.lt.s32.totalorder %s226, 1
        %s228 = scalar_select %p227, %s226, 1
        %s229 = smul.addr %s228, 8
        %s230 = scalar_lea.vmem %s2, %s229
        %s231 = sadd.s32 %s18, %s19
        %p232 = scmp.lt.s32.totalorder %s231, 0
        %s233 = scalar_select %p232, %s231, 0
        %s234 = smul.u32 2, %s233
      $region28: #{weighted_bce_loss_2d.1} parent=15 // pred_fallthru
        _
    $region16: #{weighted_bce_loss_2d.1} parent=5 // pred_fallthru
      _
    %p235 = scmp.le.s32.totalorder 1, %s11
    %p236 = scmp.lt.s32.totalorder %s11, 3
    %p237 = pnand %p235, %p236
    %p238 = pneg %p237
    // Predicated region
    $region29: #{weighted_bce_loss_2d.1} parent=5 // pred_check
      _
    $region30: #{weighted_bce_loss_2d.1} parent=5 // pred_check_branch
      %240 = sbr.rel (%p237) target = $region32
    $region31: #{weighted_bce_loss_2d.1} parent=5 // pred_region
      %s241 = ssub.s32 %s11, 1
      %s242 = sadd.s32 %s20, %s21
      %p243 = scmp.lt.s32.totalorder %s242, 0
      %s244 = scalar_select %p243, %s242, 0
      %s245 = smul.u32 2, %s244
      %p246 = scmp.lt.s32.totalorder %s245, 1
      %s247 = scalar_select %p246, %s245, 1
      %s248 = smul.addr %s247, 8
      %s249 = scalar_lea.vmem %s0, %s248
      %p250 = pneg %p55
      %p251 = pneg %p52
      %s252 = sadd.s32 %s20, %s21
      %p253 = scmp.lt.s32.totalorder %s252, 0
      %s254 = scalar_select %p253, %s252, 0
      %s255 = smul.u32 2, %s254
      %p256 = scmp.lt.s32.totalorder %s255, 1
      %s257 = scalar_select %p256, %s255, 1
      %s258 = smul.addr %s257, 8
      %s259 = scalar_lea.vmem %s1, %s258
      %p260 = pneg %p87
      %p261 = pneg %p84
      %s262 = sadd.s32 %s20, %s21
      %p263 = scmp.lt.s32.totalorder %s262, 0
      %s264 = scalar_select %p263, %s262, 0
      %s265 = smul.u32 2, %s264
      %p266 = scmp.lt.s32.totalorder %s265, 1
      %s267 = scalar_select %p266, %s265, 1
      %s268 = smul.addr %s267, 8
      %s269 = scalar_lea.vmem %s2, %s268
      %p270 = pneg %p119
      %p271 = pneg %p116
      %p272 = pneg %p145
      %p273 = pneg %p142
      %p274 = scmp.lt.s32.totalorder %s20, 1
      %s275 = scalar_select %p274, %s20, 1
      %s276 = smul.addr %s275, 2
      %s277 = smul.addr %s276, 8
      %s278 = scalar_lea.vmem %s3, %s277
      %p279 = pneg %p171
      %p280 = pneg %p168
      %p281 = scmp.lt.s32.totalorder %s20, 1
      %s282 = scalar_select %p281, %s20, 1
      %s283 = smul.addr %s282, 2
      %s284 = smul.addr %s283, 8
      %s285 = scalar_lea.vmem %s4, %s284
      %s286 = sadd.s32 %s20, %s21
      %p287 = scmp.lt.s32.totalorder %s286, 0
      %s288 = scalar_select %p287, %s286, 0
      %s289 = smul.u32 2, %s288
      %p290 = scmp.lt.s32.totalorder %s289, 1
      %s291 = scalar_select %p290, %s289, 1
      %s292 = smul.addr %s291, 8
      %s293 = scalar_lea.vmem %s0, %s292
      %s294 = sadd.s32 %s20, %s21
      %p295 = scmp.lt.s32.totalorder %s294, 0
      %s296 = scalar_select %p295, %s294, 0
      %s297 = smul.u32 2, %s296
      %s298 = sadd.s32 %s20, %s21
      %p299 = scmp.lt.s32.totalorder %s298, 0
      %s300 = scalar_select %p299, %s298, 0
      %s301 = smul.u32 2, %s300
      %p302 = scmp.lt.s32.totalorder %s301, 1
      %s303 = scalar_select %p302, %s301, 1
      %s304 = smul.addr %s303, 8
      %s305 = scalar_lea.vmem %s1, %s304
      %s306 = sadd.s32 %s20, %s21
      %p307 = scmp.lt.s32.totalorder %s306, 0
      %s308 = scalar_select %p307, %s306, 0
      %s309 = smul.u32 2, %s308
      %s310 = sadd.s32 %s20, %s21
      %p311 = scmp.lt.s32.totalorder %s310, 0
      %s312 = scalar_select %p311, %s310, 0
      %s313 = smul.u32 2, %s312
      %p314 = scmp.lt.s32.totalorder %s313, 1
      %s315 = scalar_select %p314, %s313, 1
      %s316 = smul.addr %s315, 8
      %s317 = scalar_lea.vmem %s2, %s316
      %s318 = sadd.s32 %s20, %s21
      %p319 = scmp.lt.s32.totalorder %s318, 0
      %s320 = scalar_select %p319, %s318, 0
      %s321 = smul.u32 2, %s320
      %p322 = scmp.lt.s32.totalorder %s20, 1
      %s323 = scalar_select %p322, %s20, 1
      %s324 = smul.addr %s323, 2
      %s325 = smul.addr %s324, 8
      %s326 = scalar_lea.vmem %s3, %s325
      %p327 = scmp.lt.s32.totalorder %s20, 1
      %s328 = scalar_select %p327, %s20, 1
      %s329 = smul.addr %s328, 2
      %s330 = smul.addr %s329, 8
      %s331 = scalar_lea.vmem %s4, %s330
      %p332 = scmp.eq.s32.totalorder %s21, 0
      // Predicated region
      $region33: #{weighted_bce_loss_2d.1} parent=31 // pred_check
        %p333 = pneg %p332
      $region34: #{weighted_bce_loss_2d.1} parent=31 // pred_check_branch
        %335 = sbr.rel (%p333) target = $region36
      $region35: #{weighted_bce_loss_2d.1} parent=31 // pred_region
        %336 = vst [vmem:[%s326] sm:$0xff] 0.0
        %337 = vst [vmem:[%s326 + $0x8] sm:$0xff] 0.0
        %338 = vst [vmem:[%s331] sm:$0xff] 0.0
        %339 = vst [vmem:[%s331 + $0x8] sm:$0xff] 0.0
      $region36: #{weighted_bce_loss_2d.1} parent=31 // pred_fallthru
        _
      %v340 = vld [vmem:[%s293] sm:$0xff]
      %v341 = vld [vmem:[%s293 + $0x8] sm:$0xff]
      %v342 = vld [vmem:[%s305] sm:$0xff]
      %v343 = vld [vmem:[%s305 + $0x8] sm:$0xff]
      %v344 = vld [vmem:[%s317] sm:$0xff]
      %v345 = vld [vmem:[%s317 + $0x8] sm:$0xff]
      %v346 = vmax.f32 %v340, 0.0
      %v347 = vmax.f32 %v341, 0.0
      %v348 = vmul.f32 %v340, %v342
      %v349 = vmul.f32 %v341, %v343
      %v350 = vsub.f32 %v346, %v348
      %v351 = vsub.f32 %v347, %v349
      %v352 = vand.u32 2147483647, %v340
      %v353 = vand.u32 2147483647, %v341
      %v354 = vsub.f32 0.0, %v352
      %v355 = vsub.f32 0.0, %v353
      %v356 = vmul.f32 %v354, 1.442695
      %v357 = vpow.pop %v356
      %v358 = vmul.f32 %v355, 1.442695
      %v359 = vpow.pop %v358
      %v360 = vadd.f32 %v357, 1.0
      %v361 = vlog2.pop %v360
      %v362 = vmul.f32 %v361, 0.6931472
      %v363 = vmul.f32 -0.5, %v357
      %v364 = vadd.f32 %v363, 1.0
      %v365 = vmul.f32 %v364, %v357
      %v366 = vand.u32 2147483647, %v357
      %vm367 = vcmp.lt.f32.partialorder %v366, 0.0004427343
      %v368 = vsel %vm367, %v365, %v362
      %v369 = vadd.f32 %v359, 1.0
      %v370 = vlog2.pop %v369
      %v371 = vmul.f32 %v370, 0.6931472
      %v372 = vmul.f32 -0.5, %v359
      %v373 = vadd.f32 %v372, 1.0
      %v374 = vmul.f32 %v373, %v359
      %v375 = vand.u32 2147483647, %v359
      %vm376 = vcmp.lt.f32.partialorder %v375, 0.0004427343
      %v377 = vsel %vm376, %v374, %v371
      %v378 = vadd.f32 %v350, %v368
      %v379 = vadd.f32 %v351, %v377
      %s380 = sadd.s32 %s20, %s21
      %s381 = smul.u32 %s380, 16
      %s382 = sadd.s32 %s381, 16
      %p383 = scmp.le.s32.totalorder %s382, 16
      // Predicated region
      $region37: #{weighted_bce_loss_2d.1} parent=31 // pred_check
        %p384 = pneg %p383
      $region38: #{weighted_bce_loss_2d.1} parent=31 // pred_check_branch
        %386 = sbr.rel (%p384) target = $region40
      $region39: #{weighted_bce_loss_2d.1} parent=31 // pred_region
        %v387 = vld [vmem:[%s326] sm:$0xff]
        %v388 = vld [vmem:[%s326 + $0x8] sm:$0xff]
        %v389 = vmul.f32 %v378, %v344
        %v390 = vmul.f32 %v379, %v345
        %v391 = vadd.f32 %v389, 0.0
        %v392 = vadd.f32 %v390, 0.0
        %v393 = vadd.f32 %v387, %v391
        %v394 = vadd.f32 %v388, %v392
        %395 = vst [vmem:[%s326] sm:$0xff] %v393
        %396 = vst [vmem:[%s326 + $0x8] sm:$0xff] %v394
        %v397 = vld [vmem:[%s331] sm:$0xff]
        %v398 = vld [vmem:[%s331 + $0x8] sm:$0xff]
        %v399 = vadd.f32 %v344, 0.0
        %v400 = vadd.f32 %v345, 0.0
        %v401 = vadd.f32 %v397, %v399
        %v402 = vadd.f32 %v398, %v400
        %403 = vst [vmem:[%s331] sm:$0xff] %v401
        %404 = vst [vmem:[%s331 + $0x8] sm:$0xff] %v402
      $region40: #{weighted_bce_loss_2d.1} parent=31 // pred_fallthru
        _
      %p405 = scmp.gt.s32.totalorder %s382, 16
      // Predicated region
      $region41: #{weighted_bce_loss_2d.1} parent=31 // pred_check
        %p406 = pneg %p405
      $region42: #{weighted_bce_loss_2d.1} parent=31 // pred_check_branch
        %408 = sbr.rel (%p406) target = $region44
      $region43: #{weighted_bce_loss_2d.1} parent=31 // pred_region
        %v409 = vlaneseq
        %v410 = vshrl.u32 %v409, 7
        %v411 = vadd.s32 %v410, 8
        %v412 = vstv %s381
        %v413 = vadd.s32 %v412, %v410
        %v414 = vadd.s32 %v412, %v411
        %vm415 = vcmp.lt.s32.totalorder %v413, 16
        %vm416 = vcmp.lt.s32.totalorder %v414, 16
        %v417 = vld [vmem:[%s326] sm:$0xff]
        %v418 = vld [vmem:[%s326 + $0x8] sm:$0xff]
        %v419 = vmul.f32 %v378, %v344
        %v420 = vmul.f32 %v379, %v345
        %v421 = vsel %vm415, %v419, 0.0
        %v422 = vsel %vm416, %v420, 0.0
        %v423 = vadd.f32 %v421, 0.0
        %v424 = vadd.f32 %v422, 0.0
        %v425 = vadd.f32 %v417, %v423
        %v426 = vadd.f32 %v418, %v424
        %427 = vst [vmem:[%s326] sm:$0xff] %v425
        %428 = vst [vmem:[%s326 + $0x8] sm:$0xff] %v426
        %v429 = vld [vmem:[%s331] sm:$0xff]
        %v430 = vld [vmem:[%s331 + $0x8] sm:$0xff]
        %v431 = vsel %vm415, %v344, 0.0
        %v432 = vsel %vm416, %v345, 0.0
        %v433 = vadd.f32 %v431, 0.0
        %v434 = vadd.f32 %v432, 0.0
        %v435 = vadd.f32 %v429, %v433
        %v436 = vadd.f32 %v430, %v434
        %437 = vst [vmem:[%s331] sm:$0xff] %v435
        %438 = vst [vmem:[%s331 + $0x8] sm:$0xff] %v436
      $region44: #{weighted_bce_loss_2d.1} parent=31 // pred_fallthru
        _
      %p439 = scmp.lt.s32.totalorder %s20, 1
      %s440 = scalar_select %p439, %s20, 1
      %s441 = smul.addr %s440, 2
      %s442 = smul.addr %s441, 8
      %s443 = scalar_lea.vmem %s3, %s442
      %p444 = scmp.lt.s32.totalorder %s20, 1
      %s445 = scalar_select %p444, %s20, 1
      %s446 = smul.addr %s445, 2
      %s447 = smul.addr %s446, 8
      %s448 = scalar_lea.vmem %s4, %s447
      // Predicated region
      $region45: #{weighted_bce_loss_2d.1} parent=31 // pred_check
        %p449 = pneg %p142
      $region46: #{weighted_bce_loss_2d.1} parent=31 // pred_check_branch
        %451 = sbr.rel (%p449) target = $region48
      $region47: #{weighted_bce_loss_2d.1} parent=31 // pred_region
        _
      $region48: #{weighted_bce_loss_2d.1} parent=31 // pred_fallthru
        _
      // Predicated region
      $region49: #{weighted_bce_loss_2d.1} parent=31 // pred_check
        %p452 = pneg %p168
      $region50: #{weighted_bce_loss_2d.1} parent=31 // pred_check_branch
        %454 = sbr.rel (%p452) target = $region52
      $region51: #{weighted_bce_loss_2d.1} parent=31 // pred_region
        _
      $region52: #{weighted_bce_loss_2d.1} parent=31 // pred_fallthru
        _
    $region32: #{weighted_bce_loss_2d.1} parent=5 // pred_fallthru
      _
    %p455 = scmp.le.s32.totalorder 2, %s11
    // Predicated region
    $region53: #{weighted_bce_loss_2d.1} parent=5 // pred_check
      %p456 = pneg %p455
    $region54: #{weighted_bce_loss_2d.1} parent=5 // pred_check_branch
      %458 = sbr.rel (%p456) target = $region56
    $region55: #{weighted_bce_loss_2d.1} parent=5 // pred_region
      %s459 = ssub.s32 %s11, 2
      // Predicated region
      $region57: #{weighted_bce_loss_2d.1} parent=55 // pred_check
        %p460 = pneg %p148
      $region58: #{weighted_bce_loss_2d.1} parent=55 // pred_check_branch
        %462 = sbr.rel (%p460) target = $region60
      $region59: #{weighted_bce_loss_2d.1} parent=55 // pred_region
        %p463 = scmp.lt.s32.totalorder %s22, 1
        %s464 = scalar_select %p463, %s22, 1
        %s465 = smul.addr %s464, 2
        %s466 = smul.addr %s465, 8
        %s467 = scalar_lea.vmem %s3, %s466
      $region60: #{weighted_bce_loss_2d.1} parent=55 // pred_fallthru
        _
      // Predicated region
      $region61: #{weighted_bce_loss_2d.1} parent=55 // pred_check
        %p468 = pneg %p174
      $region62: #{weighted_bce_loss_2d.1} parent=55 // pred_check_branch
        %470 = sbr.rel (%p468) target = $region64
      $region63: #{weighted_bce_loss_2d.1} parent=55 // pred_region
        %p471 = scmp.lt.s32.totalorder %s22, 1
        %s472 = scalar_select %p471, %s22, 1
        %s473 = smul.addr %s472, 2
        %s474 = smul.addr %s473, 8
        %s475 = scalar_lea.vmem %s4, %s474
      $region64: #{weighted_bce_loss_2d.1} parent=55 // pred_fallthru
        _
    $region56: #{weighted_bce_loss_2d.1} parent=5 // pred_fallthru
      _
  $region6: #{weighted_bce_loss_2d.1} parent=0 // loop_footer
    %s15 = sadd.s32 1, %s11
  $region7: #{weighted_bce_loss_2d.1} parent=0 // loop_footer_branch
    %10 = sbr.rel target = $region3
  $region8: #{weighted_bce_loss_2d.1} parent=0 // loop_exit
    _

</llo_original>
